<compile_context>
chip_gen: v7x
topology: tpu7x:2x2x1
jax: 0.10.0
libtpu: 0.0.40
codegen_flags: <defaults>
</compile_context>

<pallas_src>
import functools

import jax
import jax.numpy as jnp
import numpy as np
from jax import lax
from jax.experimental import pallas as pl
from jax.experimental.pallas import tpu as pltpu

# Contract last dim of LHS with last dim of RHS (i.e. A @ B.T) without materializing .T.
_DN_LAST = (((1,), (1,)), ((), ()))


def vqvae_kernel(x_ref, w_ref, b_ref, e_ref, esq_ref, xr_ref, loss_ref, acc_ref, *, inv_n):
    step = pl.program_id(0)

    @pl.when(step == 0)
    def _():
        acc_ref[...] = jnp.zeros_like(acc_ref)

    x = x_ref[...].astype(jnp.float32)          # [TB, D]
    w = w_ref[...].astype(jnp.float32)          # [D, D]  (out, in)
    b = b_ref[...].astype(jnp.float32)          # [1, D]
    e = e_ref[...].astype(jnp.float32)          # [K, D]
    e_sq = esq_ref[...].astype(jnp.float32)     # [1, K]  (precomputed ||E_k||^2)

    # ---- Linear: z = x @ W.T + b  (contract on last dims; no in-kernel transpose) ----
    z = lax.dot_general(x, w, _DN_LAST, preferred_element_type=jnp.float32) + b   # [TB, D]

    # ---- distances up to a per-row constant: d = ||E||^2 - 2 z.E^T  (z_sq dropped;
    #      it is constant per row so it cannot change the argmin) ----
    ze = lax.dot_general(z, e, _DN_LAST, preferred_element_type=jnp.float32)      # [TB, K]
    d = e_sq - 2.0 * ze                                                           # [TB, K]

    # ---- argmin (first minimum, torch tie-break) via min + iota, then one-hot gather ----
    K = d.shape[1]
    min_d = jnp.min(d, axis=-1, keepdims=True)                                    # [TB, 1]
    iota = lax.broadcasted_iota(jnp.int32, d.shape, 1)                            # [TB, K]
    idx = jnp.min(jnp.where(d <= min_d, iota, K), axis=-1, keepdims=True)         # [TB, 1]
    onehot = (iota == idx).astype(jnp.float32)                                    # [TB, K]
    z_q = jnp.dot(onehot, e, preferred_element_type=jnp.float32)                  # [TB, D]

    # ---- loss accumulation (same forward value for dictionary & commitment loss) ----
    diff = z - z_q
    acc_ref[...] += jnp.sum(diff * diff).reshape(1, 1)

    # ---- straight-through estimator: forward value of x_recon is z_q ----
    xr_ref[...] = z_q.astype(xr_ref.dtype)

    @pl.when(step == pl.num_programs(0) - 1)
    def _():
        loss_ref[...] = acc_ref[...] * inv_n


def neural_network_forward(x, w, b, e):
    """x: [B, D] f32, w: [D, D] (out,in), b: [D], e: [K, D]. Returns dict like the torch module."""
    B, D = x.shape
    K = e.shape[0]

    b2 = b.reshape(1, D).astype(jnp.float32)
    # Hoisted codebook norm (would be cached alongside the codebook in a real model).
    e_sq = jnp.sum(e.astype(jnp.float32) * e.astype(jnp.float32), axis=-1).reshape(1, K)

    # Batch tile: big tiles amortize per-grid-step overhead; at demo sizes use the whole batch.
    if B > 512 and B % 512 == 0:
        tb = 512
    else:
        tb = B
    grid = (B // tb,)
    inv_n = 1.0 / float(B * D)

    kernel = functools.partial(vqvae_kernel, inv_n=inv_n)

    x_recon, loss = pl.pallas_call(
        kernel,
        out_shape=(
            jax.ShapeDtypeStruct((B, D), x.dtype),
            jax.ShapeDtypeStruct((1, 1), jnp.float32),
        ),
        grid_spec=pltpu.PrefetchScalarGridSpec(
            num_scalar_prefetch=0,
            grid=grid,
            in_specs=[
                pl.BlockSpec((tb, D), lambda i: (i, 0)),   # x: streamed per batch tile
                pl.BlockSpec((D, D), lambda i: (0, 0)),    # W: resident
                pl.BlockSpec((1, D), lambda i: (0, 0)),    # b: resident
                pl.BlockSpec((K, D), lambda i: (0, 0)),    # codebook E: resident
                pl.BlockSpec((1, K), lambda i: (0, 0)),    # ||E||^2: resident
            ],
            out_specs=(
                pl.BlockSpec((tb, D), lambda i: (i, 0)),   # x_recon: streamed out per tile
                pl.BlockSpec((1, 1), lambda i: (0, 0)),    # single scalar loss (written once)
            ),
            scratch_shapes=[pltpu.VMEM((1, 1), jnp.float32)],
        ),
        # The batch grid axis carries the loss accumulator -> "arbitrary" (not megacore-split).
        compiler_params=pltpu.CompilerParams(dimension_semantics=("arbitrary",)),
    )(x, w, b2, e, e_sq)

    mse = loss[0, 0]
    # detach() only affects gradients; forward values of both losses are identical.
    return {
        "dictionary_loss": mse,
        "commitment_loss": mse,
        "x_recon": x_recon,
    }


def _reference(x, w, b, e):
    z = x @ w.T + b[None, :]
    d = (z * z).sum(-1, keepdims=True) - 2.0 * z @ e.T + (e * e).sum(-1)[None, :]
    idx = jnp.argmin(d, axis=-1)
    z_q = e[idx]
    mse = jnp.mean((z - z_q) ** 2)
    return {"dictionary_loss": mse, "commitment_loss": mse, "x_recon": z_q}


if __name__ == "__main__":
    embedding_dim = 2
    num_embeddings = 16
    batch = 8

    key = jax.random.PRNGKey(0)
    kx, kw, kb, ke = jax.random.split(key, 4)
    x = jax.random.normal(kx, (batch, embedding_dim), dtype=jnp.float32)
    # nn.Linear(embedding_dim, embedding_dim): weight [out, in], bias [out]
    w = jax.random.normal(kw, (embedding_dim, embedding_dim), dtype=jnp.float32) * 0.5
    b = jax.random.normal(kb, (embedding_dim,), dtype=jnp.float32) * 0.1
    # VectorQuantizer codebook: [num_embeddings, embedding_dim]
    e = jax.random.normal(ke, (num_embeddings, embedding_dim), dtype=jnp.float32)

    out = neural_network_forward(x, w, b, e)
    jax.block_until_ready(out)

    ref = _reference(x, w, b, e)
    assert np.allclose(np.asarray(out["x_recon"]), np.asarray(ref["x_recon"]), atol=1e-5)
    assert np.allclose(float(out["dictionary_loss"]), float(ref["dictionary_loss"]), atol=1e-5)
    assert np.allclose(float(out["commitment_loss"]), float(ref["commitment_loss"]), atol=1e-5)

    print("KERNEL_OK")
</pallas_src>

<mosaic_0001>
module attributes {stable_mosaic.version = 11 : i64} {
  func.func @vqvae_kernel(%arg0: i32, %arg1: memref<8x2xf32, #tpu.memory_space<vmem>>, %arg2: memref<2x2xf32, #tpu.memory_space<vmem>>, %arg3: memref<1x2xf32, #tpu.memory_space<vmem>>, %arg4: memref<16x2xf32, #tpu.memory_space<vmem>>, %arg5: memref<1x16xf32, #tpu.memory_space<vmem>>, %arg6: memref<8x2xf32, #tpu.memory_space<vmem>>, %arg7: memref<1x1xf32, #tpu.memory_space<vmem>>, %arg8: memref<1x1xf32, #tpu.memory_space<vmem>>) attributes {dimension_semantics = [#tpu.dimension_semantics<arbitrary>], iteration_bounds = array<i64: 1>, scalar_prefetch = 0 : i64, scratch_operands = 1 : i64, tpu.core_type = #tpu.core_type<tc>, window_params = [{transform_indices = @transform_0, window_bounds = array<i64: 8, 2>}, {pipeline_mode = #tpu.pipeline_mode<synchronous>, transform_indices = @transform_1, window_bounds = array<i64: 2, 2>}, {pipeline_mode = #tpu.pipeline_mode<synchronous>, transform_indices = @transform_2, window_bounds = array<i64: 1, 2>}, {pipeline_mode = #tpu.pipeline_mode<synchronous>, transform_indices = @transform_3, window_bounds = array<i64: 16, 2>}, {pipeline_mode = #tpu.pipeline_mode<synchronous>, transform_indices = @transform_4, window_bounds = array<i64: 1, 16>}, {transform_indices = @transform_5, window_bounds = array<i64: 8, 2>}, {pipeline_mode = #tpu.pipeline_mode<synchronous>, transform_indices = @transform_6, window_bounds = array<i64: 1, 1>}]} {
    %c0_i32 = arith.constant 0 : i32
    %0 = arith.cmpi eq, %arg0, %c0_i32 : i32
    %1 = arith.extui %0 : i1 to i32
    %c0_i32_0 = arith.constant 0 : i32
    %2 = arith.cmpi ne, %1, %c0_i32_0 : i32
    scf.if %2 {
      %cst_24 = arith.constant 0.000000e+00 : f32
      %44 = vector.broadcast %cst_24 : f32 to vector<1x1xf32>
      %c0_25 = arith.constant 0 : index
      %c0_26 = arith.constant 0 : index
      %45 = vector.load %arg8[%c0_25, %c0_26] : memref<1x1xf32, #tpu.memory_space<vmem>>, vector<1x1xf32>
      tpu.vector_store %arg8[%c0_25, %c0_26], %44 {strides = array<i32>} : memref<1x1xf32, #tpu.memory_space<vmem>>, vector<1x1xf32>,
    } else {
    }
    %c0 = arith.constant 0 : index
    %c0_1 = arith.constant 0 : index
    %3 = vector.load %arg1[%c0, %c0_1] : memref<8x2xf32, #tpu.memory_space<vmem>>, vector<8x2xf32>
    %c0_2 = arith.constant 0 : index
    %c0_3 = arith.constant 0 : index
    %4 = vector.load %arg2[%c0_2, %c0_3] : memref<2x2xf32, #tpu.memory_space<vmem>>, vector<2x2xf32>
    %c0_4 = arith.constant 0 : index
    %c0_5 = arith.constant 0 : index
    %5 = vector.load %arg3[%c0_4, %c0_5] : memref<1x2xf32, #tpu.memory_space<vmem>>, vector<1x2xf32>
    %c0_6 = arith.constant 0 : index
    %c0_7 = arith.constant 0 : index
    %6 = vector.load %arg4[%c0_6, %c0_7] : memref<16x2xf32, #tpu.memory_space<vmem>>, vector<16x2xf32>
    %c0_8 = arith.constant 0 : index
    %c0_9 = arith.constant 0 : index
    %7 = vector.load %arg5[%c0_8, %c0_9] : memref<1x16xf32, #tpu.memory_space<vmem>>, vector<1x16xf32>
    %cst = arith.constant dense<0.000000e+00> : vector<8x2xf32>
    %8 = tpu.matmul %3, %4, %cst {dimension_numbers = #tpu.dot_dimension_numbers<[1], [1], [0], [0], [0, 0, 1, 0], [], []>} : vector<8x2xf32>, vector<2x2xf32>, vector<8x2xf32> -> vector<8x2xf32>
    %9 = vector.broadcast %5 : vector<1x2xf32> to vector<8x2xf32>
    %10 = arith.addf %8, %9 : vector<8x2xf32>
    %cst_10 = arith.constant dense<0.000000e+00> : vector<8x16xf32>
    %11 = tpu.matmul %10, %6, %cst_10 {dimension_numbers = #tpu.dot_dimension_numbers<[1], [1], [0], [0], [0, 0, 1, 0], [], []>} : vector<8x2xf32>, vector<16x2xf32>, vector<8x16xf32> -> vector<8x16xf32>
    %cst_11 = arith.constant 2.000000e+00 : f32
    %12 = vector.broadcast %cst_11 : f32 to vector<8x16xf32>
    %13 = arith.mulf %12, %11 : vector<8x16xf32>
    %14 = vector.broadcast %7 : vector<1x16xf32> to vector<8x16xf32>
    %15 = arith.subf %14, %13 : vector<8x16xf32>
    %cst_12 = arith.constant dense<0x7F800000> : vector<8xf32>
    %16 = vector.multi_reduction <minimumf>, %15, %cst_12 [1] : vector<8x16xf32> to vector<8xf32>
    %17 = vector.shape_cast %16 : vector<8xf32> to vector<8x1xf32>
    %18 = tpu.iota {dimensions = array<i32: 1>} : vector<8x16xi32>
    %19 = vector.broadcast %17 : vector<8x1xf32> to vector<8x16xf32>
    %20 = arith.cmpf ole, %15, %19 : vector<8x16xf32>
    %c16_i32 = arith.constant 16 : i32
    %21 = vector.broadcast %c16_i32 : i32 to vector<8x16xi32>
    %22 = arith.select %20, %18, %21 : vector<8x16xi1>, vector<8x16xi32>
    %cst_13 = arith.constant dense<2147483647> : vector<8xi32>
    %23 = vector.multi_reduction <minsi>, %22, %cst_13 [1] : vector<8x16xi32> to vector<8xi32>
    %24 = vector.shape_cast %23 : vector<8xi32> to vector<8x1xi32>
    %25 = vector.broadcast %24 : vector<8x1xi32> to vector<8x16xi32>
    %26 = arith.cmpi eq, %18, %25 : vector<8x16xi32>
    %27 = arith.extui %26 : vector<8x16xi1> to vector<8x16xi32>
    %28 = arith.sitofp %27 : vector<8x16xi32> to vector<8x16xf32>
    %cst_14 = arith.constant dense<0.000000e+00> : vector<8x2xf32>
    %29 = tpu.matmul %28, %6, %cst_14 {dimension_numbers = #tpu.dot_dimension_numbers<[1], [0], [0], [1], [0, 0, 1, 1], [], []>} : vector<8x16xf32>, vector<16x2xf32>, vector<8x2xf32> -> vector<8x2xf32>
    %30 = arith.subf %10, %29 : vector<8x2xf32>
    %c0_15 = arith.constant 0 : index
    %c0_16 = arith.constant 0 : index
    %31 = vector.load %arg8[%c0_15, %c0_16] : memref<1x1xf32, #tpu.memory_space<vmem>>, vector<1x1xf32>
    %32 = arith.mulf %30, %30 : vector<8x2xf32>
    %33 = vector.shape_cast %32 : vector<8x2xf32> to vector<1x8x2xf32>
    %cst_17 = arith.constant dense<0.000000e+00> : vector<1xf32>
    %34 = vector.multi_reduction <add>, %33, %cst_17 [1, 2] : vector<1x8x2xf32> to vector<1xf32>
    %35 = vector.shape_cast %34 : vector<1xf32> to vector<1x1x1xf32>
    %36 = vector.extract %35[0, 0, 0] : f32 from vector<1x1x1xf32>
    %37 = vector.broadcast %36 : f32 to vector<1x1xf32>
    %38 = arith.addf %31, %37 : vector<1x1xf32>
    %c0_18 = arith.constant 0 : index
    %c0_19 = arith.constant 0 : index
    %39 = vector.load %arg8[%c0_18, %c0_19] : memref<1x1xf32, #tpu.memory_space<vmem>>, vector<1x1xf32>
    tpu.vector_store %arg8[%c0_18, %c0_19], %38 {strides = array<i32>} : memref<1x1xf32, #tpu.memory_space<vmem>>, vector<1x1xf32>,
    %c0_20 = arith.constant 0 : index
    %c0_21 = arith.constant 0 : index
    %40 = vector.load %arg6[%c0_20, %c0_21] : memref<8x2xf32, #tpu.memory_space<vmem>>, vector<8x2xf32>
    tpu.vector_store %arg6[%c0_20, %c0_21], %29 {strides = array<i32>} : memref<8x2xf32, #tpu.memory_space<vmem>>, vector<8x2xf32>,
    %c0_i32_22 = arith.constant 0 : i32
    %41 = arith.cmpi eq, %arg0, %c0_i32_22 : i32
    %42 = arith.extui %41 : i1 to i32
    %c0_i32_23 = arith.constant 0 : i32
    %43 = arith.cmpi ne, %42, %c0_i32_23 : i32
    scf.if %43 {
      %c0_24 = arith.constant 0 : index
      %c0_25 = arith.constant 0 : index
      %44 = vector.load %arg8[%c0_24, %c0_25] : memref<1x1xf32, #tpu.memory_space<vmem>>, vector<1x1xf32>
      %cst_26 = arith.constant 6.250000e-02 : f32
      %45 = vector.broadcast %cst_26 : f32 to vector<1x1xf32>
      %46 = arith.mulf %44, %45 : vector<1x1xf32>
      %c0_27 = arith.constant 0 : index
      %c0_28 = arith.constant 0 : index
      %47 = vector.load %arg7[%c0_27, %c0_28] : memref<1x1xf32, #tpu.memory_space<vmem>>, vector<1x1xf32>
      tpu.vector_store %arg7[%c0_27, %c0_28], %46 {strides = array<i32>} : memref<1x1xf32, #tpu.memory_space<vmem>>, vector<1x1xf32>,
    } else {
    }
    return
  }
  func.func @transform_0(%arg0: i32) -> (i32, i32) {
    %c0_i32 = arith.constant 0 : i32
    %c0_i32_0 = arith.constant 0 : i32
    return %arg0, %c0_i32 : i32, i32
  }
  func.func @transform_1(%arg0: i32) -> (i32, i32) {
    %c0_i32 = arith.constant 0 : i32
    %c0_i32_0 = arith.constant 0 : i32
    %c0_i32_1 = arith.constant 0 : i32
    return %c0_i32, %c0_i32_0 : i32, i32
  }
  func.func @transform_2(%arg0: i32) -> (i32, i32) {
    %c0_i32 = arith.constant 0 : i32
    %c0_i32_0 = arith.constant 0 : i32
    %c0_i32_1 = arith.constant 0 : i32
    return %c0_i32, %c0_i32_0 : i32, i32
  }
  func.func @transform_3(%arg0: i32) -> (i32, i32) {
    %c0_i32 = arith.constant 0 : i32
    %c0_i32_0 = arith.constant 0 : i32
    %c0_i32_1 = arith.constant 0 : i32
    return %c0_i32, %c0_i32_0 : i32, i32
  }
  func.func @transform_4(%arg0: i32) -> (i32, i32) {
    %c0_i32 = arith.constant 0 : i32
    %c0_i32_0 = arith.constant 0 : i32
    %c0_i32_1 = arith.constant 0 : i32
    return %c0_i32, %c0_i32_0 : i32, i32
  }
  func.func @transform_5(%arg0: i32) -> (i32, i32) {
    %c0_i32 = arith.constant 0 : i32
    %c0_i32_0 = arith.constant 0 : i32
    return %arg0, %c0_i32 : i32, i32
  }
  func.func @transform_6(%arg0: i32) -> (i32, i32) {
    %c0_i32 = arith.constant 0 : i32
    %c0_i32_0 = arith.constant 0 : i32
    %c0_i32_1 = arith.constant 0 : i32
    return %c0_i32, %c0_i32_0 : i32, i32
  }
}

</mosaic_0001>

<llo_original>
// kernel: tpu_custom_call.1
$region0: #{tpu_custom_call.1}
  #allocation0 [shape = 'u32[]', space=smem, size = 0x4, offset = 0x4, fixed_abs, tag = 'smem constant byte address 0x4 - core index']
  #allocation1 [shape = 'u32[144,128]{1,0:T(1,128)}', space=vmem, size = 0x12000, scoped, tag = 'internal scratch']
  #allocation2 [shape = 'f32[1,1]{1,0:T(1,128)}', space=vmem, size = 0x200, scoped, tag = 'scratch operand']
  %s0 = inlined_call_operand.vmem [shape: f32[8,2], index: 0, kind: input, shape index: {}]
  %s1 = inlined_call_operand.vmem [shape: f32[2,2], index: 1, kind: input, shape index: {}]
  %s2 = inlined_call_operand.vmem [shape: f32[1,2], index: 2, kind: input, shape index: {}]
  %s3 = inlined_call_operand.vmem [shape: f32[16,2], index: 3, kind: input, shape index: {}]
  %s4 = inlined_call_operand.vmem [shape: f32[1,16], index: 4, kind: input, shape index: {}]
  %s5 = inlined_call_operand.vmem [shape: f32[8,2], index: 5, kind: output, shape index: {0}]
  %s6 = inlined_call_operand.hbm [shape: f32[1,1], index: 6, kind: output, shape index: {1}]
  %7 = xla_tuple %s5, %s6
  %s8 = sld [smem:[#allocation0]]
  $region46: #{tpu_custom_call.1} parent=0
    _
  %s10 = ssub.s32 1, %s8
  %s11 = scalar_select 0, %s10, %s8
  $region1: #{tpu_custom_call.1} parent=0
    #allocation3 [shape = 'u8[512]{0}', space=vmem, size = 0x400, scoped, tag = 'output window, operand 1, single buffered']
    #allocation4 [shape = 's32[1]{0}', space=sflag, size = 0x4, scoped, tag = 'scoped memory for tpu_custom_call.1']
    %12 = vsyncpa [#allocation4], 0
    // Predicated region
    $region2: #{tpu_custom_call.1} parent=1 // pred_check
      _
    $region3: #{tpu_custom_call.1} parent=1 // pred_check_branch
      %14 = sbr.rel (0) target = $region5
    $region4: #{tpu_custom_call.1} parent=1 // pred_region
      _
    $region5: #{tpu_custom_call.1} parent=1 // pred_fallthru
      _
    // Predicated region
    $region6: #{tpu_custom_call.1} parent=1 // pred_check
      _
    $region7: #{tpu_custom_call.1} parent=1 // pred_check_branch
      %16 = sbr.rel (0) target = $region9
    $region8: #{tpu_custom_call.1} parent=1 // pred_region
      _
    $region9: #{tpu_custom_call.1} parent=1 // pred_fallthru
      _
    // Predicated region
    $region10: #{tpu_custom_call.1} parent=1 // pred_check
      _
    $region11: #{tpu_custom_call.1} parent=1 // pred_check_branch
      %18 = sbr.rel (0) target = $region13
    $region12: #{tpu_custom_call.1} parent=1 // pred_region
      _
    $region13: #{tpu_custom_call.1} parent=1 // pred_fallthru
      _
    // Predicated region
    $region14: #{tpu_custom_call.1} parent=1 // pred_check
      _
    $region15: #{tpu_custom_call.1} parent=1 // pred_check_branch
      %20 = sbr.rel (0) target = $region17
    $region16: #{tpu_custom_call.1} parent=1 // pred_region
      _
    $region17: #{tpu_custom_call.1} parent=1 // pred_fallthru
      _
    // Predicated region
    $region18: #{tpu_custom_call.1} parent=1 // pred_check
      _
    $region19: #{tpu_custom_call.1} parent=1 // pred_check_branch
      %22 = sbr.rel (0) target = $region21
    $region20: #{tpu_custom_call.1} parent=1 // pred_region
      _
    $region21: #{tpu_custom_call.1} parent=1 // pred_fallthru
      _
    %p23 = scmp.eq.s32.totalorder 0, 0
    // Predicated region
    $region22: #{tpu_custom_call.1} parent=1 // pred_check
      %p24 = pneg %p23
    $region23: #{tpu_custom_call.1} parent=1 // pred_check_branch
      %26 = sbr.rel (%p24) target = $region25
    $region24: #{tpu_custom_call.1} parent=1 // pred_region
      %vm27 = vcmask 0
      %28 = vst.msk [vmem:[#allocation2] sm:$0x1] %vm27, 0.0
    $region25: #{tpu_custom_call.1} parent=1 // pred_fallthru
      _
    %v29 = vld [vmem:[%s0] sm:$0xff]
    %v30 = vld [vmem:[%s1] sm:$0x3]
    %v31 = vld [vmem:[%s2] sm:$0x1]
    %v32 = vld [vmem:[%s3] sm:$0xff]
    %v33 = vld [vmem:[%s3 + $0x8] sm:$0xff]
    %v34 = vld [vmem:[%s4] sm:$0x1]
    %v36 = vlaneseq
    %v37 = vshrl.u32 %v36, 7
    %v38 = vsub.s32 0, %v37
    %v39 = vrot.slane %v31, %v38
    %vm41 = vcmask 15360
    %v43 = vsel %vm41, %v29, 0
    %v46 = vsel %vm41, %v30, 0
    %48 = vmatprep.subr.mxu0 0.0
    %49 = vmatpush1.xpose.msra.mxu0 %v46
    %50 = vmatprep.subr.mxu0 0.0
    %51 = vmatpush1.xpose.msra.mxu0 0.0
    %52 = vmatprep.subr.mxu0 0.0
    %53 = vmatpush1.xpose.msra.mxu0 0.0
    %54 = vmatprep.subr.mxu0 0.0
    %55 = vmatpush1.xpose.msra.mxu0 0.0
    %56 = vmatprep.subr.mxu0 0.0
    %57 = vmatpush1.xpose.msra.mxu0 0.0
    %58 = vmatprep.subr.mxu0 0.0
    %59 = vmatpush1.xpose.msra.mxu0 0.0
    %60 = vmatprep.subr.mxu0 0.0
    %61 = vmatpush1.xpose.msra.mxu0 0.0
    %62 = vmatprep.subr.mxu0 0.0
    %63 = vmatpush1.xpose.msra.mxu0 0.0
    %64 = vmatprep.subr.mxu0 0.0
    %65 = vmatpush1.xpose.msra.mxu0 0.0
    %66 = vmatprep.subr.mxu0 0.0
    %67 = vmatpush1.xpose.msra.mxu0 0.0
    %68 = vmatprep.subr.mxu0 0.0
    %69 = vmatpush1.xpose.msra.mxu0 0.0
    %70 = vmatprep.subr.mxu0 0.0
    %71 = vmatpush1.xpose.msra.mxu0 0.0
    %72 = vmatprep.subr.mxu0 0.0
    %73 = vmatpush1.xpose.msra.mxu0 0.0
    %74 = vmatprep.subr.mxu0 0.0
    %75 = vmatpush1.xpose.msra.mxu0 0.0
    %76 = vmatprep.subr.mxu0 0.0
    %77 = vmatpush1.xpose.msra.mxu0 0.0
    %78 = vmatprep.subr.mxu0 0.0
    %79 = vmatpush1.xpose.msra.mxu0 0.0
    %80 = vmatprep.subr.mxu0 0.0
    %81 = vmatpush1.xpose.msra.mxu0 0.0
    %82 = vmatprep.subr.mxu0 0.0
    %83 = vmatpush1.xpose.msra.mxu0 0.0
    %84 = vmatprep.subr.mxu0 0.0
    %85 = vmatpush1.xpose.msra.mxu0 0.0
    %86 = vmatprep.subr.mxu0 0.0
    %87 = vmatpush1.xpose.msra.mxu0 0.0
    %88 = vmatprep.subr.mxu0 0.0
    %89 = vmatpush1.xpose.msra.mxu0 0.0
    %90 = vmatprep.subr.mxu0 0.0
    %91 = vmatpush1.xpose.msra.mxu0 0.0
    %92 = vmatprep.subr.mxu0 0.0
    %93 = vmatpush1.xpose.msra.mxu0 0.0
    %94 = vmatprep.subr.mxu0 0.0
    %95 = vmatpush1.xpose.msra.mxu0 0.0
    %96 = vmatprep.subr.mxu0 0.0
    %97 = vmatpush1.xpose.msra.mxu0 0.0
    %98 = vmatprep.subr.mxu0 0.0
    %99 = vmatpush1.xpose.msra.mxu0 0.0
    %100 = vmatprep.subr.mxu0 0.0
    %101 = vmatpush1.xpose.msra.mxu0 0.0
    %102 = vmatprep.subr.mxu0 0.0
    %103 = vmatpush1.xpose.msra.mxu0 0.0
    %104 = vmatprep.subr.mxu0 0.0
    %105 = vmatpush1.xpose.msra.mxu0 0.0
    %106 = vmatprep.subr.mxu0 0.0
    %107 = vmatpush1.xpose.msra.mxu0 0.0
    %108 = vmatprep.subr.mxu0 0.0
    %109 = vmatpush1.xpose.msra.mxu0 0.0
    %110 = vmatprep.subr.mxu0 0.0
    %111 = vmatpush1.xpose.msra.mxu0 0.0
    %112 = vmatprep.mubr.f32.mxu0 0.0
    %113 = vmatmul.mubr.f32.gmra.mrb[0].mxu0 %v43
    %v114 = vpop.f32.mrb[0].mxu0
    %v115 = vadd.f32 %v39, %v114
    %v116 = vpop.f32.mrb[0].mxu0
    %117 = vdwg.mxu0
    %v119 = vsel %vm41, %v115, 0
    %v122 = vsel %vm41, %v32, 0
    %v125 = vsel %vm41, %v33, 0
    %127 = vmatprep.subr.mxu0 0.0
    %128 = vmatpush1.xpose.msra.mxu0 %v122
    %129 = vmatprep.subr.mxu0 0.0
    %130 = vmatpush1.xpose.msra.mxu0 %v125
    %131 = vmatprep.subr.mxu0 0.0
    %132 = vmatpush1.xpose.msra.mxu0 0.0
    %133 = vmatprep.subr.mxu0 0.0
    %134 = vmatpush1.xpose.msra.mxu0 0.0
    %135 = vmatprep.subr.mxu0 0.0
    %136 = vmatpush1.xpose.msra.mxu0 0.0
    %137 = vmatprep.subr.mxu0 0.0
    %138 = vmatpush1.xpose.msra.mxu0 0.0
    %139 = vmatprep.subr.mxu0 0.0
    %140 = vmatpush1.xpose.msra.mxu0 0.0
    %141 = vmatprep.subr.mxu0 0.0
    %142 = vmatpush1.xpose.msra.mxu0 0.0
    %143 = vmatprep.subr.mxu0 0.0
    %144 = vmatpush1.xpose.msra.mxu0 0.0
    %145 = vmatprep.subr.mxu0 0.0
    %146 = vmatpush1.xpose.msra.mxu0 0.0
    %147 = vmatprep.subr.mxu0 0.0
    %148 = vmatpush1.xpose.msra.mxu0 0.0
    %149 = vmatprep.subr.mxu0 0.0
    %150 = vmatpush1.xpose.msra.mxu0 0.0
    %151 = vmatprep.subr.mxu0 0.0
    %152 = vmatpush1.xpose.msra.mxu0 0.0
    %153 = vmatprep.subr.mxu0 0.0
    %154 = vmatpush1.xpose.msra.mxu0 0.0
    %155 = vmatprep.subr.mxu0 0.0
    %156 = vmatpush1.xpose.msra.mxu0 0.0
    %157 = vmatprep.subr.mxu0 0.0
    %158 = vmatpush1.xpose.msra.mxu0 0.0
    %159 = vmatprep.subr.mxu0 0.0
    %160 = vmatpush1.xpose.msra.mxu0 0.0
    %161 = vmatprep.subr.mxu0 0.0
    %162 = vmatpush1.xpose.msra.mxu0 0.0
    %163 = vmatprep.subr.mxu0 0.0
    %164 = vmatpush1.xpose.msra.mxu0 0.0
    %165 = vmatprep.subr.mxu0 0.0
    %166 = vmatpush1.xpose.msra.mxu0 0.0
    %167 = vmatprep.subr.mxu0 0.0
    %168 = vmatpush1.xpose.msra.mxu0 0.0
    %169 = vmatprep.subr.mxu0 0.0
    %170 = vmatpush1.xpose.msra.mxu0 0.0
    %171 = vmatprep.subr.mxu0 0.0
    %172 = vmatpush1.xpose.msra.mxu0 0.0
    %173 = vmatprep.subr.mxu0 0.0
    %174 = vmatpush1.xpose.msra.mxu0 0.0
    %175 = vmatprep.subr.mxu0 0.0
    %176 = vmatpush1.xpose.msra.mxu0 0.0
    %177 = vmatprep.subr.mxu0 0.0
    %178 = vmatpush1.xpose.msra.mxu0 0.0
    %179 = vmatprep.subr.mxu0 0.0
    %180 = vmatpush1.xpose.msra.mxu0 0.0
    %181 = vmatprep.subr.mxu0 0.0
    %182 = vmatpush1.xpose.msra.mxu0 0.0
    %183 = vmatprep.subr.mxu0 0.0
    %184 = vmatpush1.xpose.msra.mxu0 0.0
    %185 = vmatprep.subr.mxu0 0.0
    %186 = vmatpush1.xpose.msra.mxu0 0.0
    %187 = vmatprep.subr.mxu0 0.0
    %188 = vmatpush1.xpose.msra.mxu0 0.0
    %189 = vmatprep.subr.mxu0 0.0
    %190 = vmatpush1.xpose.msra.mxu0 0.0
    %191 = vmatprep.mubr.f32.mxu0 0.0
    %192 = vmatmul.mubr.f32.gmra.mrb[0].mxu0 %v119
    %v193 = vpop.f32.mrb[0].mxu0
    %v194 = vadd.f32 0.0, %v193
    %v195 = vpop.f32.mrb[0].mxu0
    %196 = vdwg.mxu0
    %v197 = vmul.f32 %v194, 2.0
    %v199 = vlaneseq
    %v200 = vshrl.u32 %v199, 7
    %v201 = vsub.s32 0, %v200
    %v202 = vrot.slane %v34, %v201
    %v204 = vsub.f32 %v202, %v197
    %vm205 = vcmask 130048
    %v206 = vsel %vm205, %v204, inf
    %207 = vmin.xlane.f32.xlu0 %v206
    %v208 = vpop.xlane.xlu0 %207
    %v209 = vlaneseq
    %v210 = vand.u32 %v209, 127
    %vm211 = vcmp.le.f32.partialorder %v204, %v208
    %v212 = vsel %vm211, %v210, 16
    %v213 = vsel %vm205, %v212, 2147483647
    %v214 = vand.u32 %v213, 65535
    %v215 = vshra.s32 %v213, 16
    %v216 = vcvt.s32.f32 %v214
    %v217 = vcvt.s32.f32 %v215
    %218 = vmin.xlane.f32.xlu0 %v217
    %v219 = vpop.xlane.xlu0 %218
    %vm220 = vcmp.eq.f32.partialorder %v217, %v219
    %v221 = vsel %vm220, %v216, inf
    %222 = vmin.xlane.f32.xlu0 %v221
    %v223 = vpop.xlane.xlu0 %222
    %v224 = vcvt.f32.s32 %v223
    %v225 = vcvt.f32.s32 %v219
    %v226 = vshll.u32 %v225, 16
    %v227 = vadd.s32 %v226, %v224
    %vm228 = vcmp.eq.s32.totalorder %v210, %v227
    %v229 = vsel %vm228, 1, 0
    %v230 = vcvt.s32.f32 %v229
    %v232 = vsel %vm205, %v230, 0
    %234 = vmatprep.subr.mxu0 0.0
    %235 = vmatpush1.msra.mxu0 %v32
    %236 = vmatprep.subr.mxu0 0.0
    %237 = vmatpush1.msra.mxu0 %v33
    %238 = vmatprep.subr.mxu0 0.0
    %239 = vmatpush1.msra.mxu0 0.0
    %240 = vmatprep.subr.mxu0 0.0
    %241 = vmatpush1.msra.mxu0 0.0
    %242 = vmatprep.subr.mxu0 0.0
    %243 = vmatpush1.msra.mxu0 0.0
    %244 = vmatprep.subr.mxu0 0.0
    %245 = vmatpush1.msra.mxu0 0.0
    %246 = vmatprep.subr.mxu0 0.0
    %247 = vmatpush1.msra.mxu0 0.0
    %248 = vmatprep.subr.mxu0 0.0
    %249 = vmatpush1.msra.mxu0 0.0
    %250 = vmatprep.subr.mxu0 0.0
    %251 = vmatpush1.msra.mxu0 0.0
    %252 = vmatprep.subr.mxu0 0.0
    %253 = vmatpush1.msra.mxu0 0.0
    %254 = vmatprep.subr.mxu0 0.0
    %255 = vmatpush1.msra.mxu0 0.0
    %256 = vmatprep.subr.mxu0 0.0
    %257 = vmatpush1.msra.mxu0 0.0
    %258 = vmatprep.subr.mxu0 0.0
    %259 = vmatpush1.msra.mxu0 0.0
    %260 = vmatprep.subr.mxu0 0.0
    %261 = vmatpush1.msra.mxu0 0.0
    %262 = vmatprep.subr.mxu0 0.0
    %263 = vmatpush1.msra.mxu0 0.0
    %264 = vmatprep.subr.mxu0 0.0
    %265 = vmatpush1.msra.mxu0 0.0
    %266 = vmatprep.subr.mxu0 0.0
    %267 = vmatpush1.msra.mxu0 0.0
    %268 = vmatprep.subr.mxu0 0.0
    %269 = vmatpush1.msra.mxu0 0.0
    %270 = vmatprep.subr.mxu0 0.0
    %271 = vmatpush1.msra.mxu0 0.0
    %272 = vmatprep.subr.mxu0 0.0
    %273 = vmatpush1.msra.mxu0 0.0
    %274 = vmatprep.subr.mxu0 0.0
    %275 = vmatpush1.msra.mxu0 0.0
    %276 = vmatprep.subr.mxu0 0.0
    %277 = vmatpush1.msra.mxu0 0.0
    %278 = vmatprep.subr.mxu0 0.0
    %279 = vmatpush1.msra.mxu0 0.0
    %280 = vmatprep.subr.mxu0 0.0
    %281 = vmatpush1.msra.mxu0 0.0
    %282 = vmatprep.subr.mxu0 0.0
    %283 = vmatpush1.msra.mxu0 0.0
    %284 = vmatprep.subr.mxu0 0.0
    %285 = vmatpush1.msra.mxu0 0.0
    %286 = vmatprep.subr.mxu0 0.0
    %287 = vmatpush1.msra.mxu0 0.0
    %288 = vmatprep.subr.mxu0 0.0
    %289 = vmatpush1.msra.mxu0 0.0
    %290 = vmatprep.subr.mxu0 0.0
    %291 = vmatpush1.msra.mxu0 0.0
    %292 = vmatprep.subr.mxu0 0.0
    %293 = vmatpush1.msra.mxu0 0.0
    %294 = vmatprep.subr.mxu0 0.0
    %295 = vmatpush1.msra.mxu0 0.0
    %296 = vmatprep.subr.mxu0 0.0
    %297 = vmatpush1.msra.mxu0 0.0
    %298 = vmatprep.mubr.f32.mxu0 0.0
    %299 = vmatmul.mubr.f32.gmra.mrb[0].mxu0 %v232
    %v300 = vpop.f32.mrb[0].mxu0
    %v301 = vadd.f32 0.0, %v300
    %v302 = vpop.f32.mrb[0].mxu0
    %303 = vdwg.mxu0
    %v304 = vsub.f32 %v115, %v301
    %v305 = vld [vmem:[#allocation2] sm:$0x1]
    %v306 = vmul.f32 %v304, %v304
    %v307 = vsel %vm41, %v306, 0.0
    %308 = vadd.xlane.f32.xlu0 %v307
    %v309 = vpop.xlane.xlu0 %308
    %v310 = vrot.slane %v309, 4
    %v311 = vadd.f32 %v309, %v310
    %v312 = vrot.slane %v311, 2
    %v313 = vadd.f32 %v311, %v312
    %v314 = vrot.slane %v313, 1
    %v315 = vadd.f32 %v313, %v314
    %s316 = vtos %v315
    %v317 = vstv %s316
    %v318 = vadd.f32 %v305, %v317
    %vm319 = vcmask 0
    %320 = vst.msk [vmem:[#allocation2] sm:$0x1] %vm319, %v318
    %321 = vst.msk [vmem:[%s5] sm:$0xff] %vm41, %v301
    // Predicated region
    $region26: #{tpu_custom_call.1} parent=1 // pred_check
      %p322 = pneg %p23
    $region27: #{tpu_custom_call.1} parent=1 // pred_check_branch
      %324 = sbr.rel (%p322) target = $region29
    $region28: #{tpu_custom_call.1} parent=1 // pred_region
      %v325 = vld [vmem:[#allocation2] sm:$0x1]
      %v326 = vmul.f32 %v325, 0.0625
      %327 = vst.msk [vmem:[#allocation3] sm:$0x1] %vm319, %v326
    $region29: #{tpu_custom_call.1} parent=1 // pred_fallthru
      _
    // Predicated region
    $region30: #{tpu_custom_call.1} parent=1 // pred_check
      _
    $region31: #{tpu_custom_call.1} parent=1 // pred_check_branch
      %329 = sbr.rel (0) target = $region33
    $region32: #{tpu_custom_call.1} parent=1 // pred_region
      _
    $region33: #{tpu_custom_call.1} parent=1 // pred_fallthru
      _
    // Predicated region
    $region34: #{tpu_custom_call.1} parent=1 // pred_check
      _
    $region35: #{tpu_custom_call.1} parent=1 // pred_check_branch
      %331 = sbr.rel (0) target = $region37
    $region36: #{tpu_custom_call.1} parent=1 // pred_region
      %s333 = ssub.s32 16, 16
      %334 = vsyncadd [#allocation4], %s333
      %s336 = sshll.u32 [#allocation3], 4
      %s337 = int_to_ptr.vmem [resolvable:$true] %s336
      %339 = dma.vmem_to_hbm [thread:$0]  %s337, 16, %s6, [#allocation4]
    $region37: #{tpu_custom_call.1} parent=1 // pred_fallthru
      _
    // Predicated region
    $region38: #{tpu_custom_call.1} parent=1 // pred_check
      _
    $region39: #{tpu_custom_call.1} parent=1 // pred_check_branch
      %341 = sbr.rel (0) target = $region41
    $region40: #{tpu_custom_call.1} parent=1 // pred_region
      _
    $region41: #{tpu_custom_call.1} parent=1 // pred_fallthru
      _
    // Predicated region
    $region42: #{tpu_custom_call.1} parent=1 // pred_check
      _
    $region43: #{tpu_custom_call.1} parent=1 // pred_check_branch
      %343 = sbr.rel (0) target = $region45
    $region44: #{tpu_custom_call.1} parent=1 // pred_region
      %344 = dma.done [#allocation4], 16
    $region45: #{tpu_custom_call.1} parent=1 // pred_fallthru
      _
    %345 = vsyncpa [#allocation4], 1

</llo_original>
